<compile_context>
chip_gen: v5e
topology: v5e:2x2
jax: 0.10.0
libtpu: 0.0.40
codegen_flags: <defaults>
</compile_context>

<pallas_src>
import functools

import jax
import jax.numpy as jnp
from jax.experimental import pallas as pl
from jax.experimental.pallas import tpu as pltpu


def _gce_kernel(logits_ref, targets_ref, out_ref, *, q, eps, n_total, block_rows):
    i = pl.program_id(0)

    x = logits_ref[...].astype(jnp.float32)                  # (TB, C)
    tgt = targets_ref[...]                                    # (TB, 1) int32

    # Validity mask for the (possibly out-of-bounds) tail block.
    row = i * block_rows + jax.lax.broadcasted_iota(jnp.int32, (block_rows, 1), 0)
    valid = row < n_total                                      # (TB, 1) bool
    x = jnp.where(valid, x, 0.0)                               # neutralize tail garbage

    # Numerically stable softmax pieces; only the target column is normalized,
    # so the full (TB, C) probs tile is never materialized.
    m = jnp.max(x, axis=-1, keepdims=True)                     # (TB, 1)
    e = jnp.exp(x - m)                                         # (TB, C)
    s = jnp.sum(e, axis=-1, keepdims=True)                     # (TB, 1)

    col = jax.lax.broadcasted_iota(jnp.int32, x.shape, dimension=1)
    p_num = jnp.sum(jnp.where(col == tgt, e, 0.0), axis=-1, keepdims=True)  # (TB, 1)
    p = p_num * pl.reciprocal(s, approx=True)                  # (TB, 1)
    p = jnp.maximum(p, jnp.float32(eps))                       # clamp(min=eps)

    if q == 0.0:
        loss = -jnp.log(p)
    else:
        loss = (1.0 - jnp.power(p, jnp.float32(q))) / jnp.float32(q)

    psum = jnp.sum(jnp.where(valid, loss, 0.0))                # per-block partial sum
    # Lane-dense (8, 128) store of the partial; wrapper reads [:, 0, 0].
    out_ref[...] = jnp.broadcast_to(psum, (1, 8, 128)).astype(jnp.float32)


def _pick_block_rows(n, c, itemsize, target_bytes=8 << 20):
    """Rows per tile so a tile moves ~target_bytes of logits (min 16 rows)."""
    rows = target_bytes // max(1, c * itemsize)
    rows = max(16, (int(rows) // 16) * 16)   # multiple of 16: safe for f32 and bf16 packing
    n_ceil = ((n + 15) // 16) * 16
    return int(min(rows, n_ceil))


def gce_loss(logits, targets, q=0.7, eps=1e-6, block_rows=None):
    """GCE loss. logits: (N, C) float, targets: (N,) int. Returns scalar mean loss."""
    assert 0.0 <= q <= 1.0, "q must be in [0, 1]"
    n, c = logits.shape
    itemsize = jnp.dtype(logits.dtype).itemsize
    if block_rows is None:
        block_rows = _pick_block_rows(n, c, itemsize)
    num_blocks = pl.cdiv(n, block_rows)

    targets2d = targets.astype(jnp.int32).reshape(n, 1)
    kernel = functools.partial(
        _gce_kernel, q=float(q), eps=float(eps), n_total=n, block_rows=block_rows
    )

    # Explicit scoped-VMEM budget: 2 buffers of the logits tile + headroom,
    # never above v7x's 64 MiB physical VMEM.
    tile_bytes = block_rows * c * itemsize
    vmem_limit = int(min(64 << 20, max(32 << 20, 2 * tile_bytes + (4 << 20))))

    partials = pl.pallas_call(
        kernel,
        out_shape=jax.ShapeDtypeStruct((num_blocks, 8, 128), jnp.float32),
        grid_spec=pltpu.PrefetchScalarGridSpec(
            num_scalar_prefetch=0,
            grid=(num_blocks,),
            in_specs=[
                pl.BlockSpec((block_rows, c), lambda i: (i, 0)),
                pl.BlockSpec((block_rows, 1), lambda i: (i, 0)),
            ],
            out_specs=pl.BlockSpec((1, 8, 128), lambda i: (i, 0, 0)),
        ),
        compiler_params=pltpu.CompilerParams(
            dimension_semantics=("parallel",),   # independent steps -> 2 TCs on v7x
            vmem_limit_bytes=vmem_limit,
        ),
    )(logits, targets2d)

    # Tiny final reduction of per-block partials + mean, done in XLA.
    return jnp.sum(partials[:, 0, 0]) / jnp.float32(n)


def _gce_ref(logits, targets, q=0.7, eps=1e-6):
    probs = jax.nn.softmax(logits.astype(jnp.float32), axis=1)
    p = jnp.take_along_axis(probs, targets[:, None].astype(jnp.int32), axis=1)[:, 0]
    p = jnp.maximum(p, eps)
    if q == 0.0:
        loss = -jnp.log(p)
    else:
        loss = (1.0 - p ** q) / q
    return jnp.mean(loss)


if __name__ == "__main__":
    key = jax.random.PRNGKey(0)
    k1, k2 = jax.random.split(key)

    N, C = 16, 128  # small demo batch; class axis = lane axis
    logits = jax.random.normal(k1, (N, C), dtype=jnp.float32)
    targets = jax.random.randint(k2, (N,), 0, C, dtype=jnp.int32)

    out = gce_loss(logits, targets, q=0.7, eps=1e-6)
    out = jax.block_until_ready(out)

    ref = _gce_ref(logits, targets, q=0.7, eps=1e-6)
    # approx reciprocal in the kernel perturbs p by ~1e-4 relative; loss is a
    # scalar O(1), so rtol=1e-4 is an ample yet meaningful check.
    assert jnp.allclose(out, ref, rtol=1e-4, atol=1e-6), (out, ref)
    print("KERNEL_OK")
</pallas_src>

<mosaic_0001>
module attributes {stable_mosaic.version = 11 : i64} {
  func.func @_gce_kernel(%arg0: i32, %arg1: memref<16x128xf32, #tpu.memory_space<vmem>>, %arg2: memref<16x1xi32, #tpu.memory_space<vmem>>, %arg3: memref<1x8x128xf32, #tpu.memory_space<vmem>>) attributes {dimension_semantics = [#tpu.dimension_semantics<parallel>], iteration_bounds = array<i64: 1>, scalar_prefetch = 0 : i64, scratch_operands = 0 : i64, tpu.core_type = #tpu.core_type<tc>, window_params = [{transform_indices = @transform_0, window_bounds = array<i64: 16, 128>}, {transform_indices = @transform_1, window_bounds = array<i64: 16, 1>}, {transform_indices = @transform_2, window_bounds = array<i64: 1, 8, 128>}]} {
    %c0 = arith.constant 0 : index
    %c0_0 = arith.constant 0 : index
    %0 = vector.load %arg1[%c0, %c0_0] : memref<16x128xf32, #tpu.memory_space<vmem>>, vector<16x128xf32>
    %c0_1 = arith.constant 0 : index
    %c0_2 = arith.constant 0 : index
    %1 = vector.load %arg2[%c0_1, %c0_2] : memref<16x1xi32, #tpu.memory_space<vmem>>, vector<16x1xi32>
    %c16_i32 = arith.constant 16 : i32
    %2 = arith.muli %arg0, %c16_i32 : i32
    %3 = tpu.iota {dimensions = array<i32: 0>} : vector<16x1xi32>
    %4 = vector.broadcast %2 : i32 to vector<16x1xi32>
    %5 = arith.addi %4, %3 : vector<16x1xi32>
    %c16_i32_3 = arith.constant 16 : i32
    %6 = vector.broadcast %c16_i32_3 : i32 to vector<16x1xi32>
    %7 = arith.cmpi slt, %5, %6 : vector<16x1xi32>
    %cst = arith.constant 0.000000e+00 : f32
    %8 = vector.shape_cast %7 : vector<16x1xi1> to vector<16x1xi1>
    %9 = vector.broadcast %8 : vector<16x1xi1> to vector<16x128xi1>
    %10 = vector.broadcast %cst : f32 to vector<16x128xf32>
    %11 = arith.select %9, %0, %10 : vector<16x128xi1>, vector<16x128xf32>
    %cst_4 = arith.constant dense<0xFF800000> : vector<16xf32>
    %12 = vector.multi_reduction <maximumf>, %11, %cst_4 [1] : vector<16x128xf32> to vector<16xf32>
    %13 = vector.shape_cast %12 : vector<16xf32> to vector<16x1xf32>
    %14 = vector.broadcast %13 : vector<16x1xf32> to vector<16x128xf32>
    %15 = arith.subf %11, %14 : vector<16x128xf32>
    %16 = math.exp %15 : vector<16x128xf32>
    %cst_5 = arith.constant dense<0.000000e+00> : vector<16xf32>
    %17 = vector.multi_reduction <add>, %16, %cst_5 [1] : vector<16x128xf32> to vector<16xf32>
    %18 = vector.shape_cast %17 : vector<16xf32> to vector<16x1xf32>
    %19 = tpu.iota {dimensions = array<i32: 1>} : vector<16x128xi32>
    %20 = vector.broadcast %1 : vector<16x1xi32> to vector<16x128xi32>
    %21 = arith.cmpi eq, %19, %20 : vector<16x128xi32>
    %cst_6 = arith.constant 0.000000e+00 : f32
    %22 = vector.broadcast %cst_6 : f32 to vector<16x128xf32>
    %23 = arith.select %21, %16, %22 : vector<16x128xi1>, vector<16x128xf32>
    %cst_7 = arith.constant dense<0.000000e+00> : vector<16xf32>
    %24 = vector.multi_reduction <add>, %23, %cst_7 [1] : vector<16x128xf32> to vector<16xf32>
    %25 = vector.shape_cast %24 : vector<16xf32> to vector<16x1xf32>
    %26 = tpu.reciprocal %18 {approx = true} : vector<16x1xf32> -> vector<16x1xf32>
    %27 = arith.mulf %25, %26 : vector<16x1xf32>
    %cst_8 = arith.constant 9.99999997E-7 : f32
    %28 = vector.broadcast %cst_8 : f32 to vector<16x1xf32>
    %29 = arith.maximumf %27, %28 : vector<16x1xf32>
    %cst_9 = arith.constant 0.699999988 : f32
    %30 = vector.broadcast %cst_9 : f32 to vector<16x1xf32>
    %31 = math.powf %29, %30 : vector<16x1xf32>
    %cst_10 = arith.constant 1.000000e+00 : f32
    %32 = vector.broadcast %cst_10 : f32 to vector<16x1xf32>
    %33 = arith.subf %32, %31 : vector<16x1xf32>
    %cst_11 = arith.constant 0.699999988 : f32
    %34 = vector.broadcast %cst_11 : f32 to vector<16x1xf32>
    %35 = arith.divf %33, %34 : vector<16x1xf32>
    %cst_12 = arith.constant 0.000000e+00 : f32
    %36 = vector.broadcast %cst_12 : f32 to vector<16x1xf32>
    %37 = arith.select %7, %35, %36 : vector<16x1xi1>, vector<16x1xf32>
    %38 = vector.shape_cast %37 : vector<16x1xf32> to vector<1x16x1xf32>
    %cst_13 = arith.constant dense<0.000000e+00> : vector<1xf32>
    %39 = vector.multi_reduction <add>, %38, %cst_13 [1, 2] : vector<1x16x1xf32> to vector<1xf32>
    %40 = vector.shape_cast %39 : vector<1xf32> to vector<1x1x1xf32>
    %41 = vector.extract %40[0, 0, 0] : f32 from vector<1x1x1xf32>
    %42 = vector.broadcast %41 : f32 to vector<1x8x128xf32>
    %c0_14 = arith.constant 0 : index
    %c0_15 = arith.constant 0 : index
    %c0_16 = arith.constant 0 : index
    %43 = vector.load %arg3[%c0_14, %c0_15, %c0_16] : memref<1x8x128xf32, #tpu.memory_space<vmem>>, vector<1x8x128xf32>
    tpu.vector_store %arg3[%c0_14, %c0_15, %c0_16], %42 {strides = array<i32>} : memref<1x8x128xf32, #tpu.memory_space<vmem>>, vector<1x8x128xf32>,
    return
  }
  func.func @transform_0(%arg0: i32) -> (i32, i32) {
    %c0_i32 = arith.constant 0 : i32
    %c0_i32_0 = arith.constant 0 : i32
    return %arg0, %c0_i32 : i32, i32
  }
  func.func @transform_1(%arg0: i32) -> (i32, i32) {
    %c0_i32 = arith.constant 0 : i32
    %c0_i32_0 = arith.constant 0 : i32
    return %arg0, %c0_i32 : i32, i32
  }
  func.func @transform_2(%arg0: i32) -> (i32, i32, i32) {
    %c0_i32 = arith.constant 0 : i32
    %c0_i32_0 = arith.constant 0 : i32
    %c0_i32_1 = arith.constant 0 : i32
    return %arg0, %c0_i32, %c0_i32_0 : i32, i32, i32
  }
}

</mosaic_0001>

<llo_original>
// kernel: tpu_custom_call.1
$region0: #{tpu_custom_call.1}
  #allocation0 [shape = 'u32[]', space=smem, size = 0x4, offset = 0x4, fixed_abs, tag = 'smem constant byte address 0x4 - core index']
  #allocation1 [shape = 'u32[72,128]{1,0:T(1,128)}', space=vmem, size = 0x9000, scoped, tag = 'internal scratch']
  %s0 = inlined_call_operand.vmem [shape: f32[16,128], index: 0, kind: input, shape index: {}]
  %s1 = inlined_call_operand.vmem [shape: s32[16,1], index: 1, kind: input, shape index: {}]
  %s2 = inlined_call_operand.hbm [shape: f32[1,8,128], index: 2, kind: output, shape index: {}]
  %s3 = sld [smem:[#allocation0]]
  $region18: #{tpu_custom_call.1} parent=0
    _
  %s5 = ssub.s32 1, %s3
  %s6 = scalar_select 0, %s5, %s3
  $region1: #{tpu_custom_call.1} parent=0
    #allocation2 [shape = 'u8[4096]{0}', space=vmem, size = 0x1000, scoped, tag = 'output window, operand 0, single buffered']
    #allocation3 [shape = 's32[1]{0}', space=sflag, size = 0x4, scoped, tag = 'scoped memory for tpu_custom_call.1']
    %7 = vsyncpa [#allocation3], 0
    // Predicated region
    $region2: #{tpu_custom_call.1} parent=1 // pred_check
      _
    $region3: #{tpu_custom_call.1} parent=1 // pred_check_branch
      %9 = sbr.rel (0) target = $region5
    $region4: #{tpu_custom_call.1} parent=1 // pred_region
      _
    $region5: #{tpu_custom_call.1} parent=1 // pred_fallthru
      _
    // Predicated region
    $region6: #{tpu_custom_call.1} parent=1 // pred_check
      _
    $region7: #{tpu_custom_call.1} parent=1 // pred_check_branch
      %11 = sbr.rel (0) target = $region9
    $region8: #{tpu_custom_call.1} parent=1 // pred_region
      _
    $region9: #{tpu_custom_call.1} parent=1 // pred_fallthru
      _
    %v12 = vld [vmem:[%s0] sm:$0xff]
    %v13 = vld [vmem:[%s0 + $0x8] sm:$0xff]
    %v14 = vld [vmem:[%s1] sm:$0xff]
    %v15 = vld [vmem:[%s1 + $0x8] sm:$0xff]
    %s16 = smul.u32 0, 16
    %v17 = vlaneseq
    %v18 = vshrl.u32 %v17, 7
    %v19 = vadd.s32 %v18, 8
    %v20 = vstv %s16
    %v21 = vadd.s32 %v20, %v18
    %v22 = vadd.s32 %v20, %v19
    %vm23 = vcmp.lt.s32.totalorder %v21, 16
    %vm24 = vcmp.lt.s32.totalorder %v22, 16
    %v25 = vsel %vm23, 1, 0
    %v26 = vsel %vm24, 1, 0
    %vm27 = vcmp.eq.s32.totalorder %v25, 1
    %vm28 = vcmp.eq.s32.totalorder %v26, 1
    %v29 = vsel %vm27, %v12, 0.0
    %v30 = vsel %vm28, %v13, 0.0
    %31 = vmax.xlane.f32.xlu0 %v29
    %v32 = vpop.xlane.xlu0 %31
    %33 = vmax.xlane.f32.xlu0 %v30
    %v34 = vpop.xlane.xlu0 %33
    %v35 = vsub.f32 %v29, %v32
    %v36 = vsub.f32 %v30, %v34
    %v37 = vmul.f32 %v35, 1.442695
    %v38 = vpow.pop %v37
    %v39 = vmul.f32 %v36, 1.442695
    %v40 = vpow.pop %v39
    %41 = vadd.xlane.f32.xlu0 %v38
    %v42 = vpop.xlane.xlu0 %41
    %43 = vadd.xlane.f32.xlu0 %v40
    %v44 = vpop.xlane.xlu0 %43
    %v45 = vlaneseq
    %v46 = vand.u32 %v45, 127
    %47 = vset.pattern.permute.xlu0 0
    %48 = vperm.xlu0 %47, %v14
    %v49 = vpop.permute.xlu0 %48
    %50 = vset.pattern.permute.xlu0 0
    %51 = vperm.xlu0 %50, %v15
    %v52 = vpop.permute.xlu0 %51
    %vm53 = vcmp.eq.s32.totalorder %v46, %v49
    %vm54 = vcmp.eq.s32.totalorder %v46, %v52
    %v55 = vsel %vm53, %v38, 0.0
    %v56 = vsel %vm54, %v40, 0.0
    %57 = vadd.xlane.f32.xlu0 %v55
    %v58 = vpop.xlane.xlu0 %57
    %59 = vadd.xlane.f32.xlu0 %v56
    %v60 = vpop.xlane.xlu0 %59
    %v61 = vrcp.pop %v42
    %v62 = vrcp.pop %v44
    %v63 = vmul.f32 %v58, %v61
    %v64 = vmul.f32 %v60, %v62
    %v65 = vmax.f32 %v63, 1e-06
    %v66 = vmax.f32 %v64, 1e-06
    %v67 = vpow.f32 %v65, 0.7
    %v68 = vpow.f32 %v66, 0.7
    %v69 = vsub.f32 1.0, %v67
    %v70 = vsub.f32 1.0, %v68
    %v71 = vrcp.pop 0.7
    %v72 = vmul.f32 0.7, %v71
    %v73 = vsub.f32 1.0, %v72
    %v74 = vmul.f32 %v71, %v73
    %v75 = vadd.f32 %v71, %v74
    %vm76 = vweird.f32 %v71
    %v77 = vsel %vm76, %v71, %v75
    %v78 = vmul.f32 %v69, %v77
    %v79 = vmul.f32 %v70, %v77
    %v80 = vsel %vm23, %v78, 0.0
    %v81 = vsel %vm24, %v79, 0.0
    %vm82 = vcmask 7168
    %v83 = vsel %vm82, %v80, 0.0
    %v84 = vsel %vm82, %v81, 0.0
    %v85 = vadd.f32 %v83, %v84
    %86 = vadd.xlane.f32.xlu0 %v85
    %v87 = vpop.xlane.xlu0 %86
    %v88 = vrot.slane %v87, 4
    %v89 = vadd.f32 %v87, %v88
    %v90 = vrot.slane %v89, 2
    %v91 = vadd.f32 %v89, %v90
    %v92 = vrot.slane %v91, 1
    %v93 = vadd.f32 %v91, %v92
    %s94 = vtos %v93
    %v95 = vstv %s94
    %96 = vst [vmem:[#allocation2] sm:$0xff] %v95
    // Predicated region
    $region10: #{tpu_custom_call.1} parent=1 // pred_check
      _
    $region11: #{tpu_custom_call.1} parent=1 // pred_check_branch
      %98 = sbr.rel (0) target = $region13
    $region12: #{tpu_custom_call.1} parent=1 // pred_region
      %100 = vsyncadd [#allocation3], 0
      %s102 = sshll.u32 [#allocation2], 4
      %s103 = int_to_ptr.vmem [resolvable:$true] %s102
      %s104 = sshll.u32 %s2, 4
      %s105 = int_to_ptr.hbm [resolvable:$true] %s104
      %107 = dma.vmem_to_hbm [thread:$0]  %s103, 128, %s105, [#allocation3]
    $region13: #{tpu_custom_call.1} parent=1 // pred_fallthru
      _
    // Predicated region
    $region14: #{tpu_custom_call.1} parent=1 // pred_check
      _
    $region15: #{tpu_custom_call.1} parent=1 // pred_check_branch
      %109 = sbr.rel (0) target = $region17
    $region16: #{tpu_custom_call.1} parent=1 // pred_region
      %111 = dma.done [#allocation3], 128
    $region17: #{tpu_custom_call.1} parent=1 // pred_fallthru
      _
    %112 = vsyncpa [#allocation3], 1

</llo_original>
